<compile_context>
chip_gen: v5e
topology: v5e:2x2
jax: 0.10.0
libtpu: 0.0.40
codegen_flags: <defaults>
</compile_context>

<pallas_src>
import functools

import jax
import jax.numpy as jnp
from jax.experimental import pallas as pl
from jax.experimental.pallas import tpu as pltpu

LANES = 128
_TARGET_BLOCK_BYTES = 4 * 1024 * 1024      # ~4 MiB per input DMA buffer
_VMEM_LIMIT_BYTES = 40 * 1024 * 1024       # explicit scoped-VMEM cap (all gens)


def _block_rows_for(dtype):
    """Rows per block so one input buffer is ~4 MiB (8192 f32 / 16384 bf16)."""
    itemsize = jnp.dtype(dtype).itemsize
    rows = _TARGET_BLOCK_BYTES // (LANES * itemsize)
    return max(8, (int(rows) // 8) * 8)


@functools.lru_cache(maxsize=1)
def _num_tensorcores():
    """TensorCores per chip: 2 on v7x-class hardware, 1 on v5e/v6e."""
    try:
        kind = jax.devices()[0].device_kind.lower()
    except Exception:
        return 1
    return 2 if ("v7" in kind or "7x" in kind) else 1


def _focal_elementwise(x, t, alpha, gamma):
    """Numerically-stable focal loss, elementwise, computed in f32."""
    x = x.astype(jnp.float32)
    t = t.astype(jnp.float32)
    # Share e = exp(-|x|) between sigmoid and the stable BCE log term.
    e = jnp.exp(-jnp.abs(x))
    inv = 1.0 / (1.0 + e)
    p = jnp.where(x >= 0, inv, e * inv)                 # sigmoid(x)
    ce = jnp.maximum(x, 0.0) - x * t + jnp.log1p(e)     # BCE-with-logits
    p_t = p * t + (1.0 - p) * (1.0 - t)
    one_minus_pt = 1.0 - p_t
    if gamma == 2.0:                                    # default: avoid pow
        loss = ce * (one_minus_pt * one_minus_pt)
    elif gamma == 1.0:
        loss = ce * one_minus_pt
    elif gamma == 0.0:
        loss = ce
    else:
        # Clamp before non-integer pow so tiny negative rounding can't NaN.
        loss = ce * jnp.maximum(one_minus_pt, 0.0) ** gamma
    if alpha >= 0:
        # alpha*t + (1-alpha)*(1-t) folded to one mul + one add.
        loss = ((2.0 * alpha - 1.0) * t + (1.0 - alpha)) * loss
    return loss


def _focal_reduce_kernel(x_ref, t_ref, out_ref, acc_ref, *, alpha, gamma,
                         rows, block_rows, steps, num_blocks, scale,
                         ragged_edge, has_clamped):
    # grid = (num_cores, steps); axis 0 "parallel" (per-core), axis 1 "arbitrary".
    c = pl.program_id(0)
    i = pl.program_id(1)
    blk = c * steps + i

    @pl.when(i == 0)
    def _init():
        acc_ref[...] = jnp.zeros_like(acc_ref)

    def accumulate(mask_rows):
        loss = _focal_elementwise(x_ref[...], t_ref[...], alpha, gamma)
        if mask_rows:
            # Row-index based mask (no flat int32 index -> no overflow).
            r = jax.lax.broadcasted_iota(jnp.int32, (block_rows, LANES), 0)
            loss = jnp.where(blk * block_rows + r < rows, loss, 0.0)
        # Fold the (block_rows,128) tile into the tiny (8,128) accumulator:
        # layout-preserving reshape + pure-VPU vreg adds, no big scratch RMW.
        acc_ref[...] += loss.reshape(block_rows // 8, 8, LANES).sum(axis=0)

    if ragged_edge:
        # Only the final (partial) block pays for the masking ops.
        @pl.when(blk < num_blocks - 1)
        def _full():
            accumulate(False)

        @pl.when(blk == num_blocks - 1)
        def _edge():
            accumulate(True)
    elif has_clamped:
        # Skip clamped duplicate blocks (only possible with 2 cores, odd count).
        @pl.when(blk < num_blocks)
        def _valid():
            accumulate(False)
    else:
        accumulate(False)

    @pl.when(i == steps - 1)
    def _finalize():
        if scale == 1.0:
            out_ref[...] = acc_ref[...]
        else:
            out_ref[...] = acc_ref[...] * scale   # fold the mean 1/n in-kernel


def _focal_none_kernel(x_ref, t_ref, out_ref, *, alpha, gamma):
    out_ref[...] = _focal_elementwise(
        x_ref[...], t_ref[...], alpha, gamma).astype(out_ref.dtype)


def sigmoid_focal_loss(inputs, targets, alpha=-1.0, gamma=2.0, reduction="mean"):
    if inputs.shape != targets.shape:
        raise ValueError("inputs and targets must have the same shape")
    if reduction not in ("none", "mean", "sum"):
        raise ValueError(f"unknown reduction: {reduction}")
    # alpha / gamma / reduction must be static Python values.
    alpha = float(alpha)
    gamma = float(gamma)

    orig_shape = inputs.shape
    orig_dtype = inputs.dtype
    n = int(inputs.size)

    flat_x = inputs.reshape(-1)        # free
    flat_t = targets.reshape(-1)
    rows = n // LANES                  # number of full 128-lane rows
    max_rows = _block_rows_for(orig_dtype)

    # ---------- tiny / empty inputs: plain JAX ----------
    if rows < 8:
        loss = _focal_elementwise(flat_x, flat_t, alpha, gamma)
        if reduction == "mean":
            return jnp.mean(loss).astype(orig_dtype)
        if reduction == "sum":
            return jnp.sum(loss).astype(orig_dtype)
        return loss.astype(orig_dtype).reshape(orig_shape)

    # ---------- 'mean' / 'sum': blocked reduce ----------
    if reduction in ("mean", "sum"):
        if rows > max_rows:
            main_rows, block_rows = rows, max_rows
        else:
            main_rows = (rows // 8) * 8        # keep the (8,128) acc reshape legal
            block_rows = main_rows
        num_blocks = -(-main_rows // block_rows)
        tail = n - main_rows * LANES

        if main_rows * LANES == n:             # aligned: zero-copy reshape
            x2 = flat_x.reshape(main_rows, LANES)
            t2 = flat_t.reshape(main_rows, LANES)
        else:                                  # ragged: contiguous prefix only
            x2 = jax.lax.slice(flat_x, (0,), (main_rows * LANES,)).reshape(
                main_rows, LANES)
            t2 = jax.lax.slice(flat_t, (0,), (main_rows * LANES,)).reshape(
                main_rows, LANES)

        num_cores = min(_num_tensorcores(), num_blocks)
        steps = -(-num_blocks // num_cores)
        has_clamped = num_cores * steps != num_blocks
        ragged_edge = num_blocks * block_rows != main_rows
        scale = (1.0 / n) if (reduction == "mean" and tail == 0) else 1.0

        def in_map(c, i):
            blk = c * steps + i
            if has_clamped:
                # Clamped duplicates re-read the last block; the kernel skips them.
                blk = jnp.minimum(blk, num_blocks - 1)
            return (blk, 0)

        in_spec = pl.BlockSpec((block_rows, LANES), in_map)
        kernel = functools.partial(
            _focal_reduce_kernel, alpha=alpha, gamma=gamma, rows=main_rows,
            block_rows=block_rows, steps=steps, num_blocks=num_blocks,
            scale=scale, ragged_edge=ragged_edge, has_clamped=has_clamped)

        partials = pl.pallas_call(
            kernel,
            out_shape=jax.ShapeDtypeStruct((num_cores * 8, LANES), jnp.float32),
            grid_spec=pltpu.PrefetchScalarGridSpec(
                num_scalar_prefetch=0,
                grid=(num_cores, steps),
                in_specs=[in_spec, in_spec],
                out_specs=pl.BlockSpec((8, LANES), lambda c, i: (c, 0)),
                scratch_shapes=[pltpu.VMEM((8, LANES), jnp.float32)],
            ),
            compiler_params=pltpu.CompilerParams(
                dimension_semantics=("parallel", "arbitrary"),
                vmem_limit_bytes=_VMEM_LIMIT_BYTES),
        )(x2, t2)

        main_sum = jnp.sum(partials)           # <= 2048 f32; tiny

        if tail:
            xt = jax.lax.slice(flat_x, (main_rows * LANES,), (n,))
            tt = jax.lax.slice(flat_t, (main_rows * LANES,), (n,))
            total = main_sum + jnp.sum(_focal_elementwise(xt, tt, alpha, gamma))
            if reduction == "mean":
                total = total / jnp.float32(n)
        else:
            total = main_sum                   # mean scale already folded in-kernel
        return total.astype(orig_dtype)

    # ---------- 'none': blocked elementwise ----------
    main_rows = rows
    block_rows = main_rows if main_rows <= max_rows else max_rows
    num_blocks = -(-main_rows // block_rows)
    tail = n - main_rows * LANES

    if main_rows * LANES == n:
        x2 = flat_x.reshape(main_rows, LANES)
        t2 = flat_t.reshape(main_rows, LANES)
    else:
        x2 = jax.lax.slice(flat_x, (0,), (main_rows * LANES,)).reshape(
            main_rows, LANES)
        t2 = jax.lax.slice(flat_t, (0,), (main_rows * LANES,)).reshape(
            main_rows, LANES)

    spec = pl.BlockSpec((block_rows, LANES), lambda i: (i, 0))
    kernel = functools.partial(_focal_none_kernel, alpha=alpha, gamma=gamma)
    out_main = pl.pallas_call(
        kernel,
        out_shape=jax.ShapeDtypeStruct((main_rows, LANES), orig_dtype),
        grid_spec=pltpu.PrefetchScalarGridSpec(
            num_scalar_prefetch=0,
            grid=(num_blocks,),
            in_specs=[spec, spec],
            out_specs=spec,
        ),
        compiler_params=pltpu.CompilerParams(
            dimension_semantics=("parallel",),
            vmem_limit_bytes=_VMEM_LIMIT_BYTES),
    )(x2, t2)

    if tail == 0:
        return out_main.reshape(orig_shape)
    xt = jax.lax.slice(flat_x, (main_rows * LANES,), (n,))
    tt = jax.lax.slice(flat_t, (main_rows * LANES,), (n,))
    tail_out = _focal_elementwise(xt, tt, alpha, gamma).astype(orig_dtype)
    return jnp.concatenate(
        [out_main.reshape(main_rows * LANES), tail_out]).reshape(orig_shape)


class SigmoidFocalLoss:
    """Mirror of the PyTorch Sigmoid_focal_loss module (no parameters)."""

    def __init__(self, gamma=2.0, alpha=-1.0, reduction="mean"):
        self.gamma = gamma
        self.alpha = alpha
        self.reduction = reduction

    def __call__(self, inputs, targets):
        return sigmoid_focal_loss(
            inputs, targets, alpha=self.alpha, gamma=self.gamma,
            reduction=self.reduction)


def _reference(inputs, targets, alpha=-1.0, gamma=2.0, reduction="mean"):
    p = jax.nn.sigmoid(inputs)
    ce = jnp.maximum(inputs, 0.0) - inputs * targets + jnp.log1p(jnp.exp(-jnp.abs(inputs)))
    p_t = p * targets + (1 - p) * (1 - targets)
    loss = ce * (1 - p_t) ** gamma
    if alpha >= 0:
        loss = (alpha * targets + (1 - alpha) * (1 - targets)) * loss
    if reduction == "mean":
        return loss.mean()
    if reduction == "sum":
        return loss.sum()
    return loss


if __name__ == "__main__":
    key = jax.random.PRNGKey(0)
    ks = jax.random.split(key, 8)

    # Small NCHW-like shape: batch=2, channels=4, spatial=16x16 (2048 elems).
    x = jax.random.normal(ks[0], (2, 4, 16, 16), dtype=jnp.float32)
    t = (jax.random.uniform(ks[1], (2, 4, 16, 16)) > 0.5).astype(jnp.float32)

    module = SigmoidFocalLoss(gamma=2.0, alpha=-1.0, reduction="mean")
    out = jax.block_until_ready(module(x, t))
    ref = _reference(x, t, alpha=-1.0, gamma=2.0, reduction="mean")
    assert jnp.allclose(out, ref, rtol=1e-5, atol=1e-6), (out, ref)

    # alpha-weighted + sum path.
    out2 = jax.block_until_ready(
        sigmoid_focal_loss(x, t, alpha=0.25, gamma=2.0, reduction="sum"))
    ref2 = _reference(x, t, alpha=0.25, gamma=2.0, reduction="sum")
    assert jnp.allclose(out2, ref2, rtol=1e-5, atol=1e-5), (out2, ref2)

    # reduction='none' path (elementwise).
    out3 = jax.block_until_ready(
        sigmoid_focal_loss(x, t, alpha=0.25, gamma=2.0, reduction="none"))
    ref3 = _reference(x, t, alpha=0.25, gamma=2.0, reduction="none")
    assert out3.shape == x.shape
    assert jnp.allclose(out3, ref3, rtol=1e-5, atol=1e-6)

    # Ragged size: 3*50*7 = 1050 elems -> 8 full lane-rows + 26-elem JAX tail.
    xr = jax.random.normal(ks[2], (3, 50, 7), dtype=jnp.float32)
    tr = (jax.random.uniform(ks[3], (3, 50, 7)) > 0.5).astype(jnp.float32)
    out4 = jax.block_until_ready(
        sigmoid_focal_loss(xr, tr, alpha=0.25, gamma=2.0, reduction="mean"))
    ref4 = _reference(xr, tr, alpha=0.25, gamma=2.0, reduction="mean")
    assert jnp.allclose(out4, ref4, rtol=1e-5, atol=1e-6), (out4, ref4)
    out4n = jax.block_until_ready(
        sigmoid_focal_loss(xr, tr, alpha=0.25, gamma=2.0, reduction="none"))
    ref4n = _reference(xr, tr, alpha=0.25, gamma=2.0, reduction="none")
    assert out4n.shape == xr.shape
    assert jnp.allclose(out4n, ref4n, rtol=1e-5, atol=1e-6)

    # Multi-block with a partial edge block (+ 2-core split on v7x).
    xb = jax.random.normal(ks[4], (10, 8, 128, 128), dtype=jnp.float32)
    tb = (jax.random.uniform(ks[5], (10, 8, 128, 128)) > 0.5).astype(jnp.float32)
    out5 = jax.block_until_ready(
        sigmoid_focal_loss(xb, tb, alpha=-1.0, gamma=2.0, reduction="mean"))
    ref5 = _reference(xb, tb, alpha=-1.0, gamma=2.0, reduction="mean")
    assert jnp.allclose(out5, ref5, rtol=1e-4, atol=1e-6), (out5, ref5)
    out5n = jax.block_until_ready(
        sigmoid_focal_loss(xb, tb, alpha=0.25, gamma=2.0, reduction="none"))
    ref5n = _reference(xb, tb, alpha=0.25, gamma=2.0, reduction="none")
    assert jnp.allclose(out5n, ref5n, rtol=1e-5, atol=1e-6)

    # Ragged AND multi-block flat vector: prefix slice + masked edge + JAX tail.
    nrag = 8200 * 128 + 37
    xf = jax.random.normal(ks[6], (nrag,), dtype=jnp.float32)
    tf_ = (jax.random.uniform(ks[7], (nrag,)) > 0.5).astype(jnp.float32)
    out6 = jax.block_until_ready(
        sigmoid_focal_loss(xf, tf_, alpha=0.25, gamma=2.0, reduction="sum"))
    ref6 = _reference(xf, tf_, alpha=0.25, gamma=2.0, reduction="sum")
    assert jnp.allclose(out6, ref6, rtol=1e-4, atol=1e-4), (out6, ref6)

    print("KERNEL_OK")
</pallas_src>

<mosaic_0001>
module attributes {stable_mosaic.version = 11 : i64} {
  func.func @_focal_reduce_kernel(%arg0: i32, %arg1: i32, %arg2: memref<16x128xf32, #tpu.memory_space<vmem>>, %arg3: memref<16x128xf32, #tpu.memory_space<vmem>>, %arg4: memref<8x128xf32, #tpu.memory_space<vmem>>, %arg5: memref<8x128xf32, #tpu.memory_space<vmem>>) attributes {dimension_semantics = [#tpu.dimension_semantics<parallel>, #tpu.dimension_semantics<arbitrary>], iteration_bounds = array<i64: 1, 1>, scalar_prefetch = 0 : i64, scratch_operands = 1 : i64, tpu.core_type = #tpu.core_type<tc>, window_params = [{transform_indices = @transform_0, window_bounds = array<i64: 16, 128>}, {transform_indices = @transform_1, window_bounds = array<i64: 16, 128>}, {transform_indices = @transform_2, window_bounds = array<i64: 8, 128>}]} {
    %c0_i32 = arith.constant 0 : i32
    %0 = arith.cmpi eq, %arg1, %c0_i32 : i32
    %1 = arith.extui %0 : i1 to i32
    %c0_i32_0 = arith.constant 0 : i32
    %2 = arith.cmpi ne, %1, %c0_i32_0 : i32
    scf.if %2 {
      %cst_18 = arith.constant 0.000000e+00 : f32
      %42 = vector.broadcast %cst_18 : f32 to vector<8x128xf32>
      %c0_19 = arith.constant 0 : index
      %c0_20 = arith.constant 0 : index
      %43 = vector.load %arg5[%c0_19, %c0_20] : memref<8x128xf32, #tpu.memory_space<vmem>>, vector<8x128xf32>
      tpu.vector_store %arg5[%c0_19, %c0_20], %42 {strides = array<i32>} : memref<8x128xf32, #tpu.memory_space<vmem>>, vector<8x128xf32>,
    } else {
    }
    %c0 = arith.constant 0 : index
    %c0_1 = arith.constant 0 : index
    %3 = vector.load %arg2[%c0, %c0_1] : memref<16x128xf32, #tpu.memory_space<vmem>>, vector<16x128xf32>
    %c0_2 = arith.constant 0 : index
    %c0_3 = arith.constant 0 : index
    %4 = vector.load %arg3[%c0_2, %c0_3] : memref<16x128xf32, #tpu.memory_space<vmem>>, vector<16x128xf32>
    %5 = math.absf %3 : vector<16x128xf32>
    %cst = arith.constant 0.000000e+00 : f32
    %6 = vector.broadcast %cst : f32 to vector<16x128xf32>
    %7 = arith.subf %6, %5 : vector<16x128xf32>
    %8 = math.exp %7 : vector<16x128xf32>
    %cst_4 = arith.constant 1.000000e+00 : f32
    %9 = vector.broadcast %cst_4 : f32 to vector<16x128xf32>
    %10 = arith.addf %9, %8 : vector<16x128xf32>
    %cst_5 = arith.constant 1.000000e+00 : f32
    %11 = vector.broadcast %cst_5 : f32 to vector<16x128xf32>
    %12 = arith.divf %11, %10 : vector<16x128xf32>
    %cst_6 = arith.constant 0.000000e+00 : f32
    %13 = vector.broadcast %cst_6 : f32 to vector<16x128xf32>
    %14 = arith.cmpf oge, %3, %13 : vector<16x128xf32>
    %15 = arith.mulf %8, %12 : vector<16x128xf32>
    %16 = arith.select %14, %12, %15 : vector<16x128xi1>, vector<16x128xf32>
    %cst_7 = arith.constant 0.000000e+00 : f32
    %17 = vector.broadcast %cst_7 : f32 to vector<16x128xf32>
    %18 = arith.maximumf %3, %17 : vector<16x128xf32>
    %19 = arith.mulf %3, %4 : vector<16x128xf32>
    %20 = arith.subf %18, %19 : vector<16x128xf32>
    %21 = math.log1p %8 : vector<16x128xf32>
    %22 = arith.addf %20, %21 : vector<16x128xf32>
    %23 = arith.mulf %16, %4 : vector<16x128xf32>
    %cst_8 = arith.constant 1.000000e+00 : f32
    %24 = vector.broadcast %cst_8 : f32 to vector<16x128xf32>
    %25 = arith.subf %24, %16 : vector<16x128xf32>
    %cst_9 = arith.constant 1.000000e+00 : f32
    %26 = vector.broadcast %cst_9 : f32 to vector<16x128xf32>
    %27 = arith.subf %26, %4 : vector<16x128xf32>
    %28 = arith.mulf %25, %27 : vector<16x128xf32>
    %29 = arith.addf %23, %28 : vector<16x128xf32>
    %cst_10 = arith.constant 1.000000e+00 : f32
    %30 = vector.broadcast %cst_10 : f32 to vector<16x128xf32>
    %31 = arith.subf %30, %29 : vector<16x128xf32>
    %32 = arith.mulf %31, %31 : vector<16x128xf32>
    %33 = arith.mulf %22, %32 : vector<16x128xf32>
    %c0_11 = arith.constant 0 : index
    %c0_12 = arith.constant 0 : index
    %34 = vector.load %arg5[%c0_11, %c0_12] : memref<8x128xf32, #tpu.memory_space<vmem>>, vector<8x128xf32>
    %35 = vector.shape_cast %33 : vector<16x128xf32> to vector<2x8x128xf32>
    %cst_13 = arith.constant dense<0.000000e+00> : vector<8x128xf32>
    %36 = vector.multi_reduction <add>, %35, %cst_13 [0] : vector<2x8x128xf32> to vector<8x128xf32>
    %37 = arith.addf %34, %36 : vector<8x128xf32>
    %c0_14 = arith.constant 0 : index
    %c0_15 = arith.constant 0 : index
    %38 = vector.load %arg5[%c0_14, %c0_15] : memref<8x128xf32, #tpu.memory_space<vmem>>, vector<8x128xf32>
    tpu.vector_store %arg5[%c0_14, %c0_15], %37 {strides = array<i32>} : memref<8x128xf32, #tpu.memory_space<vmem>>, vector<8x128xf32>,
    %c0_i32_16 = arith.constant 0 : i32
    %39 = arith.cmpi eq, %arg1, %c0_i32_16 : i32
    %40 = arith.extui %39 : i1 to i32
    %c0_i32_17 = arith.constant 0 : i32
    %41 = arith.cmpi ne, %40, %c0_i32_17 : i32
    scf.if %41 {
      %c0_18 = arith.constant 0 : index
      %c0_19 = arith.constant 0 : index
      %42 = vector.load %arg5[%c0_18, %c0_19] : memref<8x128xf32, #tpu.memory_space<vmem>>, vector<8x128xf32>
      %cst_20 = arith.constant 4.8828125E-4 : f32
      %43 = vector.broadcast %cst_20 : f32 to vector<8x128xf32>
      %44 = arith.mulf %42, %43 : vector<8x128xf32>
      %c0_21 = arith.constant 0 : index
      %c0_22 = arith.constant 0 : index
      %45 = vector.load %arg4[%c0_21, %c0_22] : memref<8x128xf32, #tpu.memory_space<vmem>>, vector<8x128xf32>
      tpu.vector_store %arg4[%c0_21, %c0_22], %44 {strides = array<i32>} : memref<8x128xf32, #tpu.memory_space<vmem>>, vector<8x128xf32>,
    } else {
    }
    return
  }
  func.func @transform_0(%arg0: i32, %arg1: i32) -> (i32, i32) {
    %c1_i32 = arith.constant 1 : i32
    %0 = arith.muli %arg0, %c1_i32 : i32
    %1 = arith.addi %0, %arg1 : i32
    %c0_i32 = arith.constant 0 : i32
    %c0_i32_0 = arith.constant 0 : i32
    return %1, %c0_i32 : i32, i32
  }
  func.func @transform_1(%arg0: i32, %arg1: i32) -> (i32, i32) {
    %c1_i32 = arith.constant 1 : i32
    %0 = arith.muli %arg0, %c1_i32 : i32
    %1 = arith.addi %0, %arg1 : i32
    %c0_i32 = arith.constant 0 : i32
    %c0_i32_0 = arith.constant 0 : i32
    return %1, %c0_i32 : i32, i32
  }
  func.func @transform_2(%arg0: i32, %arg1: i32) -> (i32, i32) {
    %c0_i32 = arith.constant 0 : i32
    %c0_i32_0 = arith.constant 0 : i32
    return %arg0, %c0_i32 : i32, i32
  }
}

</mosaic_0001>

<llo_original>
// kernel: tpu_custom_call.1
$region0: #{tpu_custom_call.1}
  #allocation0 [shape = 'u32[]', space=smem, size = 0x4, offset = 0x4, fixed_abs, tag = 'smem constant byte address 0x4 - core index']
  #allocation1 [shape = 'u32[72,128]{1,0:T(1,128)}', space=vmem, size = 0x9000, scoped, tag = 'internal scratch']
  #allocation2 [shape = 'f32[8,128]{1,0:T(8,128)}', space=vmem, size = 0x1000, scoped, tag = 'scratch operand']
  %s0 = inlined_call_operand.hbm [shape: f32[16,128], index: 0, kind: input, shape index: {}]
  %s1 = inlined_call_operand.hbm [shape: f32[16,128], index: 1, kind: input, shape index: {}]
  %s2 = inlined_call_operand.hbm [shape: f32[8,128], index: 2, kind: output, shape index: {}]
  %s3 = sld [smem:[#allocation0]]
  $region34: #{tpu_custom_call.1} parent=0
    _
  %s5 = ssub.s32 1, %s3
  %s6 = scalar_select 0, %s5, %s3
  $region1: #{tpu_custom_call.1} parent=0
    #allocation3 [shape = 'u8[8192]{0}', space=vmem, size = 0x2000, scoped, tag = 'input window, operand 0, single buffered']
    #allocation4 [shape = 's32[1]{0}', space=sflag, size = 0x4, scoped, tag = 'scoped memory for tpu_custom_call.1']
    #allocation5 [shape = 's32[1]{0}', space=sflag, size = 0x4, scoped, tag = 'scoped memory for tpu_custom_call.1']
    #allocation6 [shape = 'u8[8192]{0}', space=vmem, size = 0x2000, scoped, tag = 'input window, operand 1, single buffered']
    #allocation7 [shape = 's32[1]{0}', space=sflag, size = 0x4, scoped, tag = 'scoped memory for tpu_custom_call.1']
    #allocation8 [shape = 'u8[4096]{0}', space=vmem, size = 0x1000, scoped, tag = 'output window, operand 0, single buffered']
    %7 = vsyncpa [#allocation4], 0
    %8 = vsyncpa [#allocation7], 0
    %9 = vsyncpa [#allocation5], 0
    // Predicated region
    $region2: #{tpu_custom_call.1} parent=1 // pred_check
      _
    $region3: #{tpu_custom_call.1} parent=1 // pred_check_branch
      %11 = sbr.rel (0) target = $region5
    $region4: #{tpu_custom_call.1} parent=1 // pred_region
      %s12 = sadd.s32 0, 0
      %s13 = smul.u32 2, %s12
      %15 = vsyncadd [#allocation4], 0
      %s16 = smul.addr %s13, 8
      %s17 = scalar_lea.hbm %s0, %s16
      %s18 = sshll.u32 %s17, 4
      %s19 = int_to_ptr.hbm [resolvable:$true] %s18
      %s20 = sshll.u32 [#allocation3], 4
      %s21 = int_to_ptr.vmem [resolvable:$true] %s20
      %26 = dma.hbm_to_vmem [thread:$0]  %s19, 256, %s21, [#allocation4], 128, 128, 8
    $region5: #{tpu_custom_call.1} parent=1 // pred_fallthru
      _
    // Predicated region
    $region6: #{tpu_custom_call.1} parent=1 // pred_check
      _
    $region7: #{tpu_custom_call.1} parent=1 // pred_check_branch
      %28 = sbr.rel (0) target = $region9
    $region8: #{tpu_custom_call.1} parent=1 // pred_region
      %s29 = sadd.s32 0, 0
      %s30 = smul.u32 2, %s29
      %32 = vsyncadd [#allocation7], 0
      %s33 = smul.addr %s30, 8
      %s34 = scalar_lea.hbm %s1, %s33
      %s35 = sshll.u32 %s34, 4
      %s36 = int_to_ptr.hbm [resolvable:$true] %s35
      %s37 = sshll.u32 [#allocation6], 4
      %s38 = int_to_ptr.vmem [resolvable:$true] %s37
      %43 = dma.hbm_to_vmem [thread:$0]  %s36, 256, %s38, [#allocation7], 128, 128, 8
    $region9: #{tpu_custom_call.1} parent=1 // pred_fallthru
      _
    // Predicated region
    $region10: #{tpu_custom_call.1} parent=1 // pred_check
      _
    $region11: #{tpu_custom_call.1} parent=1 // pred_check_branch
      %45 = sbr.rel (0) target = $region13
    $region12: #{tpu_custom_call.1} parent=1 // pred_region
      %47 = dma.done [#allocation4], 256
    $region13: #{tpu_custom_call.1} parent=1 // pred_fallthru
      _
    // Predicated region
    $region14: #{tpu_custom_call.1} parent=1 // pred_check
      _
    $region15: #{tpu_custom_call.1} parent=1 // pred_check_branch
      %49 = sbr.rel (0) target = $region17
    $region16: #{tpu_custom_call.1} parent=1 // pred_region
      %51 = dma.done [#allocation7], 256
    $region17: #{tpu_custom_call.1} parent=1 // pred_fallthru
      _
    %s52 = sadd.s32 0, 0
    %s53 = smul.u32 2, %s52
    %s54 = sadd.s32 0, 0
    %s55 = smul.u32 2, %s54
    %p56 = scmp.eq.s32.totalorder 0, 0
    // Predicated region
    $region18: #{tpu_custom_call.1} parent=1 // pred_check
      %p57 = pneg %p56
    $region19: #{tpu_custom_call.1} parent=1 // pred_check_branch
      %59 = sbr.rel (%p57) target = $region21
    $region20: #{tpu_custom_call.1} parent=1 // pred_region
      %60 = vst [vmem:[#allocation2] sm:$0xff] 0.0
    $region21: #{tpu_custom_call.1} parent=1 // pred_fallthru
      _
    %v61 = vld [vmem:[#allocation3] sm:$0xff]
    %v62 = vld [vmem:[#allocation3 + $0x8] sm:$0xff]
    %v63 = vld [vmem:[#allocation6] sm:$0xff]
    %v64 = vld [vmem:[#allocation6 + $0x8] sm:$0xff]
    %v65 = vand.u32 2147483647, %v61
    %v66 = vand.u32 2147483647, %v62
    %v67 = vsub.f32 0.0, %v65
    %v68 = vsub.f32 0.0, %v66
    %v69 = vmul.f32 %v67, 1.442695
    %v70 = vpow.pop %v69
    %v71 = vmul.f32 %v68, 1.442695
    %v72 = vpow.pop %v71
    %v73 = vadd.f32 %v70, 1.0
    %v74 = vadd.f32 %v72, 1.0
    %v75 = vrcp.pop %v73
    %v76 = vmul.f32 %v73, %v75
    %v77 = vsub.f32 1.0, %v76
    %v78 = vmul.f32 %v75, %v77
    %v79 = vadd.f32 %v75, %v78
    %vm80 = vweird.f32 %v73
    %vm81 = vweird.f32 %v75
    %vm82 = vmor %vm80, %vm81
    %v83 = vsel %vm82, %v75, %v79
    %v84 = vand.u32 2147483647, %v73
    %vm85 = vcmp.eq.f32.partialorder %v84, 8.507059e+37
    %v86 = vand.u32 %v73, 2147483648
    %v87 = vor.u32 1.1754944e-38, %v86
    %v88 = vsel %vm85, %v87, %v83
    %v89 = vmul.f32 1.0, %v88
    %v90 = vrcp.pop %v74
    %v91 = vmul.f32 %v74, %v90
    %v92 = vsub.f32 1.0, %v91
    %v93 = vmul.f32 %v90, %v92
    %v94 = vadd.f32 %v90, %v93
    %vm95 = vweird.f32 %v74
    %vm96 = vweird.f32 %v90
    %vm97 = vmor %vm95, %vm96
    %v98 = vsel %vm97, %v90, %v94
    %v99 = vand.u32 2147483647, %v74
    %vm100 = vcmp.eq.f32.partialorder %v99, 8.507059e+37
    %v101 = vand.u32 %v74, 2147483648
    %v102 = vor.u32 1.1754944e-38, %v101
    %v103 = vsel %vm100, %v102, %v98
    %v104 = vmul.f32 1.0, %v103
    %vm105 = vcmp.ge.f32.partialorder %v61, 0.0
    %vm106 = vcmp.ge.f32.partialorder %v62, 0.0
    %v107 = vmul.f32 %v70, %v89
    %v108 = vmul.f32 %v72, %v104
    %v109 = vsel %vm105, %v89, %v107
    %v110 = vsel %vm106, %v104, %v108
    %v111 = vmax.f32 %v61, 0.0
    %v112 = vmax.f32 %v62, 0.0
    %v113 = vmul.f32 %v61, %v63
    %v114 = vmul.f32 %v62, %v64
    %v115 = vsub.f32 %v111, %v113
    %v116 = vsub.f32 %v112, %v114
    %v117 = vadd.f32 %v70, 1.0
    %v118 = vlog2.pop %v117
    %v119 = vmul.f32 %v118, 0.6931472
    %v120 = vmul.f32 -0.5, %v70
    %v121 = vadd.f32 %v120, 1.0
    %v122 = vmul.f32 %v121, %v70
    %v123 = vand.u32 2147483647, %v70
    %vm124 = vcmp.lt.f32.partialorder %v123, 0.0004427343
    %v125 = vsel %vm124, %v122, %v119
    %v126 = vadd.f32 %v72, 1.0
    %v127 = vlog2.pop %v126
    %v128 = vmul.f32 %v127, 0.6931472
    %v129 = vmul.f32 -0.5, %v72
    %v130 = vadd.f32 %v129, 1.0
    %v131 = vmul.f32 %v130, %v72
    %v132 = vand.u32 2147483647, %v72
    %vm133 = vcmp.lt.f32.partialorder %v132, 0.0004427343
    %v134 = vsel %vm133, %v131, %v128
    %v135 = vadd.f32 %v115, %v125
    %v136 = vadd.f32 %v116, %v134
    %v137 = vmul.f32 %v109, %v63
    %v138 = vmul.f32 %v110, %v64
    %v139 = vsub.f32 1.0, %v109
    %v140 = vsub.f32 1.0, %v110
    %v141 = vsub.f32 1.0, %v63
    %v142 = vsub.f32 1.0, %v64
    %v143 = vmul.f32 %v139, %v141
    %v144 = vmul.f32 %v140, %v142
    %v145 = vadd.f32 %v137, %v143
    %v146 = vadd.f32 %v138, %v144
    %v147 = vsub.f32 1.0, %v145
    %v148 = vsub.f32 1.0, %v146
    %v149 = vmul.f32 %v147, %v147
    %v150 = vmul.f32 %v148, %v148
    %v151 = vmul.f32 %v135, %v149
    %v152 = vmul.f32 %v136, %v150
    %v153 = vld [vmem:[#allocation2] sm:$0xff]
    %v154 = vadd.f32 %v151, %v152
    %v155 = vadd.f32 %v153, %v154
    %156 = vst [vmem:[#allocation2] sm:$0xff] %v155
    // Predicated region
    $region22: #{tpu_custom_call.1} parent=1 // pred_check
      %p157 = pneg %p56
    $region23: #{tpu_custom_call.1} parent=1 // pred_check_branch
      %159 = sbr.rel (%p157) target = $region25
    $region24: #{tpu_custom_call.1} parent=1 // pred_region
      %v160 = vld [vmem:[#allocation2] sm:$0xff]
      %v161 = vmul.f32 %v160, 0.00048828125
      %162 = vst [vmem:[#allocation8] sm:$0xff] %v161
    $region25: #{tpu_custom_call.1} parent=1 // pred_fallthru
      _
    // Predicated region
    $region26: #{tpu_custom_call.1} parent=1 // pred_check
      _
    $region27: #{tpu_custom_call.1} parent=1 // pred_check_branch
      %164 = sbr.rel (0) target = $region29
    $region28: #{tpu_custom_call.1} parent=1 // pred_region
      %166 = vsyncadd [#allocation5], 0
      %s168 = sshll.u32 [#allocation8], 4
      %s169 = int_to_ptr.vmem [resolvable:$true] %s168
      %s170 = sshll.u32 %s2, 4
      %s171 = int_to_ptr.hbm [resolvable:$true] %s170
      %173 = dma.vmem_to_hbm [thread:$0]  %s169, 128, %s171, [#allocation5]
    $region29: #{tpu_custom_call.1} parent=1 // pred_fallthru
      _
    // Predicated region
    $region30: #{tpu_custom_call.1} parent=1 // pred_check
      _
    $region31: #{tpu_custom_call.1} parent=1 // pred_check_branch
      %175 = sbr.rel (0) target = $region33
    $region32: #{tpu_custom_call.1} parent=1 // pred_region
      %177 = dma.done [#allocation5], 128
    $region33: #{tpu_custom_call.1} parent=1 // pred_fallthru
      _
    %178 = vsyncpa [#allocation4], 1
    %179 = vsyncpa [#allocation7], 1
    %180 = vsyncpa [#allocation5], 1

</llo_original>
